<compile_context>
chip_gen: v6e
topology: v6e:2x2x1
jax: 0.10.0
libtpu: 0.0.40
codegen_flags: <defaults>
</compile_context>

<pallas_src>
import functools
from typing import Dict, Iterable, List

import jax
import jax.numpy as jnp
from jax.experimental import pallas as pl
from jax.experimental.pallas import tpu as pltpu

_SUBLANES = 8           # second-minor block dims must be multiples of 8
_MAX_BLOCK_ROWS = 64    # rows gathered per grid step (amortizes step overhead)


def _round_up(x: int, m: int) -> int:
    return ((x + m - 1) // m) * m


def _choose_block_rows(batch: int) -> int:
    return min(_MAX_BLOCK_ROWS, _round_up(max(batch, 1), _SUBLANES))


def _vmem_capacity_bytes() -> int:
    """Per-core VMEM capacity; conservative default if the query is unavailable."""
    try:
        return int(pltpu.get_tpu_info().vmem_capacity_bytes)
    except Exception:
        return 64 * 1024 * 1024  # v7x per-TensorCore size (smallest current gen)


# --------------------------------------------------------------------------
# Fast path: whole table resident in VMEM, in-kernel dynamic row gather.
# --------------------------------------------------------------------------
def _vmem_gather_kernel(idx_ref, tab_ref, out_ref, *, block_rows):
    """idx_ref: (B_pad,) int32 in SMEM (scalar prefetch).
    tab_ref: (T, D) full table in VMEM (resident across grid steps).
    out_ref: (block_rows, D) output block for grid step i.
    """
    base = pl.program_id(0) * block_rows
    for r in range(block_rows):
        row = idx_ref[base + r]
        out_ref[pl.ds(r, 1), :] = tab_ref[pl.ds(row, 1), :]


def _gather_vmem(idx, table, block_rows, vmem_limit_bytes):
    bpad = idx.shape[0]
    t, d = table.shape
    itemsize = jnp.dtype(table.dtype).itemsize
    grid = (bpad // block_rows,)

    grid_spec = pltpu.PrefetchScalarGridSpec(
        num_scalar_prefetch=1,
        grid=grid,
        in_specs=[
            # Whole table, same block every step -> single bulk DMA, VMEM resident.
            pl.BlockSpec((t, d), lambda i, idx_ref: (0, 0)),
        ],
        out_specs=pl.BlockSpec((block_rows, d), lambda i, idx_ref: (i, 0)),
    )
    params = dict(
        dimension_semantics=("parallel",) if grid[0] > 1 else ("arbitrary",),
    )
    if vmem_limit_bytes is not None:
        params["vmem_limit_bytes"] = vmem_limit_bytes
    return pl.pallas_call(
        functools.partial(_vmem_gather_kernel, block_rows=block_rows),
        out_shape=jax.ShapeDtypeStruct((bpad, d), table.dtype),
        grid_spec=grid_spec,
        compiler_params=pltpu.CompilerParams(**params),
        cost_estimate=pl.CostEstimate(
            flops=0,
            transcendentals=0,
            bytes_accessed=(t * d + 2 * bpad * d) * itemsize + bpad * 4,
        ),
    )(idx, table)


# --------------------------------------------------------------------------
# Fallback: table too big for VMEM -> manual HBM row-gather DMAs that land
# directly in the output VMEM block (no intermediate buffer / vreg copy).
# --------------------------------------------------------------------------
def _hbm_gather_kernel(idx_ref, tab_hbm, out_ref, sem, *, block_rows):
    """idx_ref: (B_pad,) int32 in SMEM. tab_hbm: (T, D) in HBM (pl.ANY).
    out_ref: (block_rows, D) VMEM output block. sem: (block_rows,) DMA sems.
    """
    base = pl.program_id(0) * block_rows
    # Issue all row gathers first so the DMAs overlap, then wait.
    for r in range(block_rows):
        row = idx_ref[base + r]
        pltpu.make_async_copy(
            tab_hbm.at[pl.ds(row, 1), :], out_ref.at[pl.ds(r, 1), :], sem.at[r]
        ).start()
    for r in range(block_rows):
        # Only shapes / dst / sem matter for the wait; reuse row 0 as src.
        pltpu.make_async_copy(
            tab_hbm.at[pl.ds(0, 1), :], out_ref.at[pl.ds(r, 1), :], sem.at[r]
        ).wait()


def _gather_hbm(idx, table, block_rows):
    bpad = idx.shape[0]
    t, d = table.shape
    itemsize = jnp.dtype(table.dtype).itemsize
    grid = (bpad // block_rows,)

    grid_spec = pltpu.PrefetchScalarGridSpec(
        num_scalar_prefetch=1,
        grid=grid,
        in_specs=[pl.BlockSpec(memory_space=pl.ANY)],  # table stays in HBM
        out_specs=pl.BlockSpec((block_rows, d), lambda i, idx_ref: (i, 0)),
        scratch_shapes=[pltpu.SemaphoreType.DMA((block_rows,))],
    )
    return pl.pallas_call(
        functools.partial(_hbm_gather_kernel, block_rows=block_rows),
        out_shape=jax.ShapeDtypeStruct((bpad, d), table.dtype),
        grid_spec=grid_spec,
        compiler_params=pltpu.CompilerParams(
            dimension_semantics=("parallel",) if grid[0] > 1 else ("arbitrary",),
        ),
        cost_estimate=pl.CostEstimate(
            flops=0,
            transcendentals=0,
            bytes_accessed=2 * bpad * d * itemsize + bpad * 4,
        ),
    )(idx, table)


# --------------------------------------------------------------------------
# Dispatch + public API
# --------------------------------------------------------------------------
@functools.partial(jax.jit, static_argnames=("block_rows", "force_hbm"))
def _lookup_padded(idx, table, *, block_rows, force_hbm=False):
    """idx: (B_pad,) int32 with B_pad a multiple of block_rows. table: (T, D)."""
    t, d = table.shape
    itemsize = jnp.dtype(table.dtype).itemsize
    table_bytes = t * d * itemsize
    capacity = _vmem_capacity_bytes()
    # Generation-gated residency budget: ~24 MiB on v7x (64 MiB), ~56 MiB on
    # v5e/v6e (128 MiB).  Leave room for output blocks / double buffering.
    budget = max(capacity // 2 - (8 << 20), 8 << 20)

    if force_hbm or table_bytes > budget:
        return _gather_hbm(idx, table, block_rows)

    needed = table_bytes + 2 * block_rows * d * itemsize + (2 << 20)
    vmem_limit = None
    if needed > (32 << 20):  # only raise above the default scoped limit
        vmem_limit = min(int(needed) + (4 << 20), capacity - (4 << 20))
    return _gather_vmem(idx, table, block_rows, vmem_limit)


def embedding_lookup(idx: jax.Array, table: jax.Array, *, force_hbm: bool = False) -> jax.Array:
    """Gather rows of `table` at `idx` via the Pallas kernels. Returns (B, D).

    NOTE: out-of-range indices are caller UB (data-dependent read/DMA into the
    table); indices built by TaskEmbeddingModule.forward are in-range by
    construction (dict lookup raises at the Python level for unknown tasks).
    """
    idx = jnp.asarray(idx, dtype=jnp.int32)
    b = idx.shape[0]
    block_rows = _choose_block_rows(b)
    bpad = _round_up(b, block_rows)
    if bpad != b:
        idx = jnp.pad(idx, (0, bpad - b))  # pad with row 0 (always valid)
    out = _lookup_padded(idx, table, block_rows=block_rows, force_hbm=force_hbm)
    return out[:b] if bpad != b else out


class TaskEmbeddingModule:
    """JAX/Pallas port of the PyTorch TaskEmbeddingModule (forward pass only)."""

    def __init__(self, task_ids: Iterable[str], embedding_dim: int = 32,
                 key: jax.Array | None = None) -> None:
        self.task_to_idx: Dict[str, int] = {
            t: i for i, t in enumerate(sorted(task_ids))
        }
        self.embedding_dim = embedding_dim
        if key is None:
            key = jax.random.PRNGKey(0)
        # nn.init.normal_(weight, mean=0.0, std=0.02); no padding (kernel writes
        # the logical D directly, so there is no 4x byte inflation).
        self.weight = 0.02 * jax.random.normal(
            key, (len(self.task_to_idx), embedding_dim), dtype=jnp.float32)

    def forward(self, task_ids: List[str]) -> jax.Array:
        b = len(task_ids)
        idx = [self.task_to_idx[t] for t in task_ids]
        block_rows = _choose_block_rows(b)
        bpad = _round_up(b, block_rows)
        idx = idx + [0] * (bpad - b)  # pad with a valid row index
        idx_arr = jnp.asarray(idx, dtype=jnp.int32)
        out = _lookup_padded(idx_arr, self.weight, block_rows=block_rows)
        return out[:b] if bpad != b else out

    # TODO(synk): adapt_embedding / set_embedding are training-time utilities
    # (Adam inner loop over an external ARCModel / in-place weight update) and
    # are not part of the forward pass; intentionally not ported.


if __name__ == "__main__":
    key = jax.random.PRNGKey(0)

    # Small deterministic setup: 8 tasks, embedding_dim=32, batch of 4 lookups.
    task_ids = [f"task_{i}" for i in range(8)]
    module = TaskEmbeddingModule(task_ids, embedding_dim=32, key=key)

    batch_tasks = ["task_3", "task_0", "task_7", "task_3"]
    out = jax.block_until_ready(module.forward(batch_tasks))

    ref_idx = jnp.array([module.task_to_idx[t] for t in batch_tasks], dtype=jnp.int32)
    ref = module.weight[ref_idx]
    assert out.shape == (len(batch_tasks), 32)
    assert out.dtype == jnp.float32
    assert jnp.allclose(out, ref, atol=1e-6), "mismatch vs reference gather"

    # Larger batch -> multiple (R, D) grid steps on the VMEM-resident path.
    big_idx = jax.random.randint(jax.random.PRNGKey(1), (100,), 0,
                                 module.weight.shape[0], dtype=jnp.int32)
    out_big = jax.block_until_ready(embedding_lookup(big_idx, module.weight))
    assert out_big.shape == (100, 32)
    assert jnp.allclose(out_big, module.weight[big_idx], atol=1e-6), "VMEM path mismatch"

    # Exercise the HBM manual-DMA fallback path (used for tables too big for VMEM).
    out_hbm = jax.block_until_ready(
        embedding_lookup(big_idx, module.weight, force_hbm=True))
    assert jnp.allclose(out_hbm, module.weight[big_idx], atol=1e-6), "HBM path mismatch"

    print("KERNEL_OK")
</pallas_src>

<mosaic_0001>
module attributes {stable_mosaic.version = 11 : i64} {
  func.func @_vmem_gather_kernel(%arg0: i32, %arg1: memref<8xi32, #tpu.memory_space<smem>>, %arg2: memref<8x32xf32, #tpu.memory_space<vmem>>, %arg3: memref<8x32xf32, #tpu.memory_space<vmem>>) attributes {dimension_semantics = [#tpu.dimension_semantics<arbitrary>], iteration_bounds = array<i64: 1>, scalar_prefetch = 1 : i64, scratch_operands = 0 : i64, tpu.core_type = #tpu.core_type<tc>, window_params = [{pipeline_mode = #tpu.pipeline_mode<synchronous>, transform_indices = @transform_0, window_bounds = array<i64: 8, 32>}, {transform_indices = @transform_1, window_bounds = array<i64: 8, 32>}]} {
    %c8_i32 = arith.constant 8 : i32
    %0 = arith.muli %arg0, %c8_i32 : i32
    %c0_i32 = arith.constant 0 : i32
    %1 = arith.addi %0, %c0_i32 : i32
    %2 = arith.index_cast %1 : i32 to index
    %3 = memref.load %arg1[%2] : memref<8xi32, #tpu.memory_space<smem>>
    %4 = arith.index_cast %3 : i32 to index
    %c0 = arith.constant 0 : index
    %5 = vector.load %arg2[%4, %c0] : memref<8x32xf32, #tpu.memory_space<vmem>>, vector<1x32xf32>
    %c0_0 = arith.constant 0 : index
    %c0_1 = arith.constant 0 : index
    %6 = vector.load %arg3[%c0_0, %c0_1] : memref<8x32xf32, #tpu.memory_space<vmem>>, vector<1x32xf32>
    tpu.vector_store %arg3[%c0_0, %c0_1], %5 {strides = array<i32>} : memref<8x32xf32, #tpu.memory_space<vmem>>, vector<1x32xf32>,
    %c1_i32 = arith.constant 1 : i32
    %7 = arith.addi %0, %c1_i32 : i32
    %8 = arith.index_cast %7 : i32 to index
    %9 = memref.load %arg1[%8] : memref<8xi32, #tpu.memory_space<smem>>
    %10 = arith.index_cast %9 : i32 to index
    %c0_2 = arith.constant 0 : index
    %11 = vector.load %arg2[%10, %c0_2] : memref<8x32xf32, #tpu.memory_space<vmem>>, vector<1x32xf32>
    %c1 = arith.constant 1 : index
    %c0_3 = arith.constant 0 : index
    %12 = vector.load %arg3[%c1, %c0_3] : memref<8x32xf32, #tpu.memory_space<vmem>>, vector<1x32xf32>
    tpu.vector_store %arg3[%c1, %c0_3], %11 {strides = array<i32>} : memref<8x32xf32, #tpu.memory_space<vmem>>, vector<1x32xf32>,
    %c2_i32 = arith.constant 2 : i32
    %13 = arith.addi %0, %c2_i32 : i32
    %14 = arith.index_cast %13 : i32 to index
    %15 = memref.load %arg1[%14] : memref<8xi32, #tpu.memory_space<smem>>
    %16 = arith.index_cast %15 : i32 to index
    %c0_4 = arith.constant 0 : index
    %17 = vector.load %arg2[%16, %c0_4] : memref<8x32xf32, #tpu.memory_space<vmem>>, vector<1x32xf32>
    %c2 = arith.constant 2 : index
    %c0_5 = arith.constant 0 : index
    %18 = vector.load %arg3[%c2, %c0_5] : memref<8x32xf32, #tpu.memory_space<vmem>>, vector<1x32xf32>
    tpu.vector_store %arg3[%c2, %c0_5], %17 {strides = array<i32>} : memref<8x32xf32, #tpu.memory_space<vmem>>, vector<1x32xf32>,
    %c3_i32 = arith.constant 3 : i32
    %19 = arith.addi %0, %c3_i32 : i32
    %20 = arith.index_cast %19 : i32 to index
    %21 = memref.load %arg1[%20] : memref<8xi32, #tpu.memory_space<smem>>
    %22 = arith.index_cast %21 : i32 to index
    %c0_6 = arith.constant 0 : index
    %23 = vector.load %arg2[%22, %c0_6] : memref<8x32xf32, #tpu.memory_space<vmem>>, vector<1x32xf32>
    %c3 = arith.constant 3 : index
    %c0_7 = arith.constant 0 : index
    %24 = vector.load %arg3[%c3, %c0_7] : memref<8x32xf32, #tpu.memory_space<vmem>>, vector<1x32xf32>
    tpu.vector_store %arg3[%c3, %c0_7], %23 {strides = array<i32>} : memref<8x32xf32, #tpu.memory_space<vmem>>, vector<1x32xf32>,
    %c4_i32 = arith.constant 4 : i32
    %25 = arith.addi %0, %c4_i32 : i32
    %26 = arith.index_cast %25 : i32 to index
    %27 = memref.load %arg1[%26] : memref<8xi32, #tpu.memory_space<smem>>
    %28 = arith.index_cast %27 : i32 to index
    %c0_8 = arith.constant 0 : index
    %29 = vector.load %arg2[%28, %c0_8] : memref<8x32xf32, #tpu.memory_space<vmem>>, vector<1x32xf32>
    %c4 = arith.constant 4 : index
    %c0_9 = arith.constant 0 : index
    %30 = vector.load %arg3[%c4, %c0_9] : memref<8x32xf32, #tpu.memory_space<vmem>>, vector<1x32xf32>
    tpu.vector_store %arg3[%c4, %c0_9], %29 {strides = array<i32>} : memref<8x32xf32, #tpu.memory_space<vmem>>, vector<1x32xf32>,
    %c5_i32 = arith.constant 5 : i32
    %31 = arith.addi %0, %c5_i32 : i32
    %32 = arith.index_cast %31 : i32 to index
    %33 = memref.load %arg1[%32] : memref<8xi32, #tpu.memory_space<smem>>
    %34 = arith.index_cast %33 : i32 to index
    %c0_10 = arith.constant 0 : index
    %35 = vector.load %arg2[%34, %c0_10] : memref<8x32xf32, #tpu.memory_space<vmem>>, vector<1x32xf32>
    %c5 = arith.constant 5 : index
    %c0_11 = arith.constant 0 : index
    %36 = vector.load %arg3[%c5, %c0_11] : memref<8x32xf32, #tpu.memory_space<vmem>>, vector<1x32xf32>
    tpu.vector_store %arg3[%c5, %c0_11], %35 {strides = array<i32>} : memref<8x32xf32, #tpu.memory_space<vmem>>, vector<1x32xf32>,
    %c6_i32 = arith.constant 6 : i32
    %37 = arith.addi %0, %c6_i32 : i32
    %38 = arith.index_cast %37 : i32 to index
    %39 = memref.load %arg1[%38] : memref<8xi32, #tpu.memory_space<smem>>
    %40 = arith.index_cast %39 : i32 to index
    %c0_12 = arith.constant 0 : index
    %41 = vector.load %arg2[%40, %c0_12] : memref<8x32xf32, #tpu.memory_space<vmem>>, vector<1x32xf32>
    %c6 = arith.constant 6 : index
    %c0_13 = arith.constant 0 : index
    %42 = vector.load %arg3[%c6, %c0_13] : memref<8x32xf32, #tpu.memory_space<vmem>>, vector<1x32xf32>
    tpu.vector_store %arg3[%c6, %c0_13], %41 {strides = array<i32>} : memref<8x32xf32, #tpu.memory_space<vmem>>, vector<1x32xf32>,
    %c7_i32 = arith.constant 7 : i32
    %43 = arith.addi %0, %c7_i32 : i32
    %44 = arith.index_cast %43 : i32 to index
    %45 = memref.load %arg1[%44] : memref<8xi32, #tpu.memory_space<smem>>
    %46 = arith.index_cast %45 : i32 to index
    %c0_14 = arith.constant 0 : index
    %47 = vector.load %arg2[%46, %c0_14] : memref<8x32xf32, #tpu.memory_space<vmem>>, vector<1x32xf32>
    %c7 = arith.constant 7 : index
    %c0_15 = arith.constant 0 : index
    %48 = vector.load %arg3[%c7, %c0_15] : memref<8x32xf32, #tpu.memory_space<vmem>>, vector<1x32xf32>
    tpu.vector_store %arg3[%c7, %c0_15], %47 {strides = array<i32>} : memref<8x32xf32, #tpu.memory_space<vmem>>, vector<1x32xf32>,
    return
  }
  func.func @transform_0(%arg0: i32, %arg1: memref<8xi32, #tpu.memory_space<smem>>) -> (i32, i32) {
    %c0_i32 = arith.constant 0 : i32
    %c0_i32_0 = arith.constant 0 : i32
    %c0_i32_1 = arith.constant 0 : i32
    return %c0_i32, %c0_i32_0 : i32, i32
  }
  func.func @transform_1(%arg0: i32, %arg1: memref<8xi32, #tpu.memory_space<smem>>) -> (i32, i32) {
    %c0_i32 = arith.constant 0 : i32
    %c0_i32_0 = arith.constant 0 : i32
    return %arg0, %c0_i32 : i32, i32
  }
}

</mosaic_0001>

<llo_original>
// kernel: _lookup_padded.1
$region0: #{_lookup_padded.1}
  #allocation0 [shape = 'u32[]', space=smem, size = 0x4, offset = 0x4, fixed_abs, tag = 'smem constant byte address 0x4 - core index']
  #allocation1 [shape = 'u32[144,128]{1,0:T(1,128)}', space=vmem, size = 0x12000, scoped, tag = 'internal scratch']
  #allocation2 [shape = 's32[1]{0}', space=sflag, size = 0x4, scoped, tag = 'scoped memory for _lookup_padded.1']
  #allocation3 [shape = 'u8[512]{0}', space=smem, size = 0x200, scoped, tag = 'prefetched SMEM operand 0']
  %s0 = inlined_call_operand.hbm [shape: s32[8], index: 0, kind: input, shape index: {}]
  %s1 = inlined_call_operand.hbm [shape: f32[8,32], index: 1, kind: input, shape index: {}]
  %s2 = inlined_call_operand.hbm [shape: f32[8,32], index: 2, kind: output, shape index: {}]
  %s3 = sld [smem:[#allocation0]]
  $region18: #{_lookup_padded.1} parent=0
    _
  %s5 = ssub.s32 1, %s3
  %s6 = scalar_select 0, %s5, %s3
  %8 = dma.hbm_to_smem %s0, 16, [#allocation3], [#allocation2]
  %9 = dma.done [#allocation2], 16
  %10 = sfence
  $region1: #{_lookup_padded.1} parent=0
    #allocation4 [shape = 'u8[4096]{0}', space=vmem, size = 0x1000, scoped, tag = 'input window, operand 1, single buffered']
    #allocation5 [shape = 's32[1]{0}', space=sflag, size = 0x4, scoped, tag = 'scoped memory for _lookup_padded.1']
    #allocation6 [shape = 's32[1]{0}', space=sflag, size = 0x4, scoped, tag = 'scoped memory for _lookup_padded.1']
    #allocation7 [shape = 'u8[4096]{0}', space=vmem, size = 0x1000, scoped, tag = 'output window, operand 0, single buffered']
    %11 = vsyncpa [#allocation5], 0
    %12 = vsyncpa [#allocation6], 0
    // Predicated region
    $region2: #{_lookup_padded.1} parent=1 // pred_check
      _
    $region3: #{_lookup_padded.1} parent=1 // pred_check_branch
      %14 = sbr.rel (0) target = $region5
    $region4: #{_lookup_padded.1} parent=1 // pred_region
      %s16 = ssub.s32 128, 128
      %17 = vsyncadd [#allocation5], %s16
      %s19 = sshll.u32 [#allocation4], 4
      %s20 = int_to_ptr.vmem [resolvable:$true] %s19
      %22 = dma.hbm_to_vmem [thread:$0]  %s1, 128, %s20, [#allocation5]
    $region5: #{_lookup_padded.1} parent=1 // pred_fallthru
      _
    // Predicated region
    $region6: #{_lookup_padded.1} parent=1 // pred_check
      _
    $region7: #{_lookup_padded.1} parent=1 // pred_check_branch
      %24 = sbr.rel (0) target = $region9
    $region8: #{_lookup_padded.1} parent=1 // pred_region
      %25 = dma.done [#allocation5], 128
    $region9: #{_lookup_padded.1} parent=1 // pred_fallthru
      _
    %s26 = smul.u32 0, 8
    %s27 = sld [smem:[#allocation3 + %s26]]
    %s28 = scalar_lea.vmem [#allocation4], %s27
    %v29 = vld [vmem:[%s28] sm:$0x1]
    %vm30 = vcmask 253952
    %31 = vst.msk [vmem:[#allocation7] sm:$0x1] %vm30, %v29
    %s32 = sadd.s32 %s26, 1
    %s33 = sld [smem:[#allocation3 + %s32]]
    %s34 = scalar_lea.vmem [#allocation4], %s33
    %v35 = vld [vmem:[%s34] sm:$0x1]
    %36 = vst.msk [vmem:[#allocation7 + $0x1] sm:$0x1] %vm30, %v35
    %s37 = sadd.s32 %s26, 2
    %s38 = sld [smem:[#allocation3 + %s37]]
    %s39 = scalar_lea.vmem [#allocation4], %s38
    %v40 = vld [vmem:[%s39] sm:$0x1]
    %41 = vst.msk [vmem:[#allocation7 + $0x2] sm:$0x1] %vm30, %v40
    %s42 = sadd.s32 %s26, 3
    %s43 = sld [smem:[#allocation3 + %s42]]
    %s44 = scalar_lea.vmem [#allocation4], %s43
    %v45 = vld [vmem:[%s44] sm:$0x1]
    %46 = vst.msk [vmem:[#allocation7 + $0x3] sm:$0x1] %vm30, %v45
    %s47 = sadd.s32 %s26, 4
    %s48 = sld [smem:[#allocation3 + %s47]]
    %s49 = scalar_lea.vmem [#allocation4], %s48
    %v50 = vld [vmem:[%s49] sm:$0x1]
    %51 = vst.msk [vmem:[#allocation7 + $0x4] sm:$0x1] %vm30, %v50
    %s52 = sadd.s32 %s26, 5
    %s53 = sld [smem:[#allocation3 + %s52]]
    %s54 = scalar_lea.vmem [#allocation4], %s53
    %v55 = vld [vmem:[%s54] sm:$0x1]
    %56 = vst.msk [vmem:[#allocation7 + $0x5] sm:$0x1] %vm30, %v55
    %s57 = sadd.s32 %s26, 6
    %s58 = sld [smem:[#allocation3 + %s57]]
    %s59 = scalar_lea.vmem [#allocation4], %s58
    %v60 = vld [vmem:[%s59] sm:$0x1]
    %61 = vst.msk [vmem:[#allocation7 + $0x6] sm:$0x1] %vm30, %v60
    %s62 = sadd.s32 %s26, 7
    %s63 = sld [smem:[#allocation3 + %s62]]
    %s64 = scalar_lea.vmem [#allocation4], %s63
    %v65 = vld [vmem:[%s64] sm:$0x1]
    %66 = vst.msk [vmem:[#allocation7 + $0x7] sm:$0x1] %vm30, %v65
    // Predicated region
    $region10: #{_lookup_padded.1} parent=1 // pred_check
      _
    $region11: #{_lookup_padded.1} parent=1 // pred_check_branch
      %68 = sbr.rel (0) target = $region13
    $region12: #{_lookup_padded.1} parent=1 // pred_region
      %s70 = ssub.s32 128, 128
      %71 = vsyncadd [#allocation6], %s70
      %s73 = sshll.u32 [#allocation7], 4
      %s74 = int_to_ptr.vmem [resolvable:$true] %s73
      %76 = dma.vmem_to_hbm [thread:$0]  %s74, 128, %s2, [#allocation6]
    $region13: #{_lookup_padded.1} parent=1 // pred_fallthru
      _
    // Predicated region
    $region14: #{_lookup_padded.1} parent=1 // pred_check
      _
    $region15: #{_lookup_padded.1} parent=1 // pred_check_branch
      %78 = sbr.rel (0) target = $region17
    $region16: #{_lookup_padded.1} parent=1 // pred_region
      %79 = dma.done [#allocation6], 128
    $region17: #{_lookup_padded.1} parent=1 // pred_fallthru
      _
    %80 = vsyncpa [#allocation5], 1
    %81 = vsyncpa [#allocation6], 1

</llo_original>
